<compile_context>
chip_gen: v6e
topology: v6e:2x2x1
jax: 0.10.0
libtpu: 0.0.40
codegen_flags: <defaults>
</compile_context>

<pallas_src>
import functools

import jax
import jax.numpy as jnp
from jax.experimental import pallas as pl
from jax.experimental.pallas import tpu as pltpu


def _round_up(n, m):
    return ((n + m - 1) // m) * m


def classifier_kernel(x_ref, w1_ref, b1_ref, w2_ref, b2_ref, o_ref, *, classes):
    # x:  [TB, D_in]   (input dtype)   w1: [D_in, 128]  bf16   b1: [1, 128]   f32
    # w2: [128, C_pad] bf16            b2: [1, C_pad]   f32    o:  [TB, classes] f32
    x = x_ref[...].astype(jnp.bfloat16)           # in-kernel cast: no extra HBM pass

    # embedding stand-in: Linear(D_in -> 128) + ReLU, f32 accumulation on MXU.
    h = jnp.dot(x, w1_ref[...], preferred_element_type=jnp.float32) + b1_ref[...]
    h = jnp.maximum(h, 0.0)

    # fc: Linear(128 -> classes); MXU runs lane-dense (C_pad=128), store only the
    # real class columns (narrow masked VMEM store, narrow HBM writeback).
    y = jnp.dot(h.astype(jnp.bfloat16), w2_ref[...],
                preferred_element_type=jnp.float32) + b2_ref[...]
    o_ref[...] = y[:, :classes].astype(o_ref.dtype)


@functools.partial(jax.jit, static_argnames=("classes",))
def classifier_forward(x, w1, b1, w2, b2, *, classes):
    B, D_in = x.shape
    D_emb = w1.shape[1]

    # --- weights: lane-pad class dim to 128 for the MXU, cast to bf16 ---------
    # (parameters are tiny and VMEM-resident; this is a one-off negligible cost)
    c_pad = _round_up(max(classes, 128), 128)
    w2p = jnp.zeros((D_emb, c_pad), jnp.float32).at[:, :classes].set(w2)
    b2p = jnp.zeros((1, c_pad), jnp.float32).at[:, :classes].set(
        jnp.reshape(b2, (1, -1)))
    w1b = w1.astype(jnp.bfloat16)
    w2b = w2p.astype(jnp.bfloat16)
    b1f = jnp.reshape(b1, (1, -1)).astype(jnp.float32)
    b2f = b2p.astype(jnp.float32)

    # --- batch tiling ----------------------------------------------------------
    # Large tiles (multiple of 16 sublanes) amortize per-step overhead; cap at
    # ~ceil(B/2) so large batches give >= 2 grid steps (megacore on v7x).
    TILE_B_MAX = 4096
    tile_b = _round_up(B, 16)
    half_tile = max(_round_up((B + 1) // 2, 16), 16)
    tile_b = min(tile_b, half_tile, TILE_B_MAX)
    grid = (pl.cdiv(B, tile_b),)        # ragged last block handled by Pallas

    cost = pl.CostEstimate(
        flops=2 * B * (D_in * D_emb + D_emb * c_pad),
        transcendentals=0,
        bytes_accessed=(x.size * x.dtype.itemsize
                        + w1b.size * 2 + w2b.size * 2
                        + b1f.size * 4 + b2f.size * 4
                        + B * classes * 4),
    )

    kernel = functools.partial(classifier_kernel, classes=classes)

    out = pl.pallas_call(
        kernel,
        out_shape=jax.ShapeDtypeStruct((B, classes), jnp.float32),
        grid_spec=pltpu.PrefetchScalarGridSpec(
            num_scalar_prefetch=0,
            grid=grid,
            in_specs=[
                pl.BlockSpec((tile_b, D_in), lambda i: (i, 0)),   # x: tiled over batch
                pl.BlockSpec((D_in, D_emb), lambda i: (0, 0)),    # w1: resident
                pl.BlockSpec((1, D_emb), lambda i: (0, 0)),       # b1: resident
                pl.BlockSpec((D_emb, c_pad), lambda i: (0, 0)),   # w2: resident
                pl.BlockSpec((1, c_pad), lambda i: (0, 0)),       # b2: resident
            ],
            out_specs=pl.BlockSpec((tile_b, classes), lambda i: (i, 0)),
        ),
        compiler_params=pltpu.CompilerParams(
            dimension_semantics=("parallel",),          # megacore-shardable on v7x
            vmem_limit_bytes=32 * 1024 * 1024,          # safe on v5e/v6e/v7x
        ),
        cost_estimate=cost,
    )(x, w1b, b1f, w2b, b2f)

    return out


def reference_forward_f32(x, w1, b1, w2, b2):
    h = jnp.maximum(x @ w1 + b1.reshape(1, -1), 0.0)
    return h @ w2 + b2.reshape(1, -1)


def reference_forward_bf16(x, w1, b1, w2, b2):
    # Same bf16-input / f32-accumulate numerics as the kernel.
    f = lambda a: a.astype(jnp.bfloat16).astype(jnp.float32)
    h = jnp.maximum(f(x) @ f(w1) + b1.reshape(1, -1), 0.0)
    return f(h) @ f(w2) + b2.reshape(1, -1)


if __name__ == "__main__":
    key = jax.random.PRNGKey(0)
    B, D_in, D_emb, classes = 8, 32, 128, 10

    k_x, k_w1, k_b1, k_w2, k_b2 = jax.random.split(key, 5)
    x = jax.random.normal(k_x, (B, D_in), dtype=jnp.float32)

    # Deterministic synthetic parameters (PyTorch-style uniform fan-in init),
    # with 1-D biases exactly as nn.Linear exposes them.
    bound1 = 1.0 / jnp.sqrt(D_in)
    w1 = jax.random.uniform(k_w1, (D_in, D_emb), jnp.float32, -bound1, bound1)
    b1 = jax.random.uniform(k_b1, (D_emb,), jnp.float32, -bound1, bound1)
    bound2 = 1.0 / jnp.sqrt(D_emb)
    w2 = jax.random.uniform(k_w2, (D_emb, classes), jnp.float32, -bound2, bound2)
    b2 = jax.random.uniform(k_b2, (classes,), jnp.float32, -bound2, bound2)

    out = classifier_forward(x, w1, b1, w2, b2, classes=classes)
    out = jax.block_until_ready(out)
    assert out.shape == (B, classes)

    # Apples-to-apples (bf16-input) reference: tight tolerance.
    ref_bf16 = reference_forward_bf16(x, w1, b1, w2, b2)
    assert jnp.allclose(out, ref_bf16, atol=1e-3, rtol=1e-3), "mismatch vs bf16 reference"

    # Full-f32 semantic reference: loose tolerance covering bf16 rounding.
    ref_f32 = reference_forward_f32(x, w1, b1, w2, b2)
    assert jnp.allclose(out, ref_f32, atol=5e-2, rtol=5e-2), "mismatch vs f32 reference"

    print("KERNEL_OK")
</pallas_src>

<mosaic_0001>
module attributes {stable_mosaic.version = 11 : i64} {
  func.func @classifier_kernel(%arg0: i32, %arg1: memref<16x32xf32, #tpu.memory_space<vmem>>, %arg2: memref<32x128xbf16, #tpu.memory_space<vmem>>, %arg3: memref<1x128xf32, #tpu.memory_space<vmem>>, %arg4: memref<128x128xbf16, #tpu.memory_space<vmem>>, %arg5: memref<1x128xf32, #tpu.memory_space<vmem>>, %arg6: memref<16x10xf32, #tpu.memory_space<vmem>>) attributes {dimension_semantics = [#tpu.dimension_semantics<parallel>], iteration_bounds = array<i64: 1>, scalar_prefetch = 0 : i64, scratch_operands = 0 : i64, tpu.core_type = #tpu.core_type<tc>, window_params = [{transform_indices = @transform_0, window_bounds = array<i64: 16, 32>}, {pipeline_mode = #tpu.pipeline_mode<synchronous>, transform_indices = @transform_1, window_bounds = array<i64: 32, 128>}, {pipeline_mode = #tpu.pipeline_mode<synchronous>, transform_indices = @transform_2, window_bounds = array<i64: 1, 128>}, {pipeline_mode = #tpu.pipeline_mode<synchronous>, transform_indices = @transform_3, window_bounds = array<i64: 128, 128>}, {pipeline_mode = #tpu.pipeline_mode<synchronous>, transform_indices = @transform_4, window_bounds = array<i64: 1, 128>}, {transform_indices = @transform_5, window_bounds = array<i64: 16, 10>}]} {
    %c0 = arith.constant 0 : index
    %c0_0 = arith.constant 0 : index
    %0 = vector.load %arg1[%c0, %c0_0] : memref<16x32xf32, #tpu.memory_space<vmem>>, vector<16x32xf32>
    %1 = arith.truncf %0 : vector<16x32xf32> to vector<16x32xbf16>
    %c0_1 = arith.constant 0 : index
    %c0_2 = arith.constant 0 : index
    %2 = vector.load %arg2[%c0_1, %c0_2] : memref<32x128xbf16, #tpu.memory_space<vmem>>, vector<32x128xbf16>
    %cst = arith.constant dense<0.000000e+00> : vector<16x128xf32>
    %3 = tpu.matmul %1, %2, %cst {dimension_numbers = #tpu.dot_dimension_numbers<[1], [0], [0], [1], [0, 0, 1, 1], [], []>} : vector<16x32xbf16>, vector<32x128xbf16>, vector<16x128xf32> -> vector<16x128xf32>
    %c0_3 = arith.constant 0 : index
    %c0_4 = arith.constant 0 : index
    %4 = vector.load %arg3[%c0_3, %c0_4] : memref<1x128xf32, #tpu.memory_space<vmem>>, vector<1x128xf32>
    %5 = vector.broadcast %4 : vector<1x128xf32> to vector<16x128xf32>
    %6 = arith.addf %3, %5 : vector<16x128xf32>
    %cst_5 = arith.constant 0.000000e+00 : f32
    %7 = vector.broadcast %cst_5 : f32 to vector<16x128xf32>
    %8 = arith.maximumf %6, %7 : vector<16x128xf32>
    %9 = arith.truncf %8 : vector<16x128xf32> to vector<16x128xbf16>
    %c0_6 = arith.constant 0 : index
    %c0_7 = arith.constant 0 : index
    %10 = vector.load %arg4[%c0_6, %c0_7] : memref<128x128xbf16, #tpu.memory_space<vmem>>, vector<128x128xbf16>
    %cst_8 = arith.constant dense<0.000000e+00> : vector<16x128xf32>
    %11 = tpu.matmul %9, %10, %cst_8 {dimension_numbers = #tpu.dot_dimension_numbers<[1], [0], [0], [1], [0, 0, 1, 1], [], []>} : vector<16x128xbf16>, vector<128x128xbf16>, vector<16x128xf32> -> vector<16x128xf32>
    %c0_9 = arith.constant 0 : index
    %c0_10 = arith.constant 0 : index
    %12 = vector.load %arg5[%c0_9, %c0_10] : memref<1x128xf32, #tpu.memory_space<vmem>>, vector<1x128xf32>
    %13 = vector.broadcast %12 : vector<1x128xf32> to vector<16x128xf32>
    %14 = arith.addf %11, %13 : vector<16x128xf32>
    %15 = vector.extract_strided_slice %14 {offsets = [0, 0], sizes = [16, 10], strides = [1, 1]} : vector<16x128xf32> to vector<16x10xf32>
    %c0_11 = arith.constant 0 : index
    %c0_12 = arith.constant 0 : index
    %16 = vector.load %arg6[%c0_11, %c0_12] : memref<16x10xf32, #tpu.memory_space<vmem>>, vector<16x10xf32>
    tpu.vector_store %arg6[%c0_11, %c0_12], %15 {strides = array<i32>} : memref<16x10xf32, #tpu.memory_space<vmem>>, vector<16x10xf32>,
    return
  }
  func.func @transform_0(%arg0: i32) -> (i32, i32) {
    %c0_i32 = arith.constant 0 : i32
    %c0_i32_0 = arith.constant 0 : i32
    return %arg0, %c0_i32 : i32, i32
  }
  func.func @transform_1(%arg0: i32) -> (i32, i32) {
    %c0_i32 = arith.constant 0 : i32
    %c0_i32_0 = arith.constant 0 : i32
    %c0_i32_1 = arith.constant 0 : i32
    return %c0_i32, %c0_i32_0 : i32, i32
  }
  func.func @transform_2(%arg0: i32) -> (i32, i32) {
    %c0_i32 = arith.constant 0 : i32
    %c0_i32_0 = arith.constant 0 : i32
    %c0_i32_1 = arith.constant 0 : i32
    return %c0_i32, %c0_i32_0 : i32, i32
  }
  func.func @transform_3(%arg0: i32) -> (i32, i32) {
    %c0_i32 = arith.constant 0 : i32
    %c0_i32_0 = arith.constant 0 : i32
    %c0_i32_1 = arith.constant 0 : i32
    return %c0_i32, %c0_i32_0 : i32, i32
  }
  func.func @transform_4(%arg0: i32) -> (i32, i32) {
    %c0_i32 = arith.constant 0 : i32
    %c0_i32_0 = arith.constant 0 : i32
    %c0_i32_1 = arith.constant 0 : i32
    return %c0_i32, %c0_i32_0 : i32, i32
  }
  func.func @transform_5(%arg0: i32) -> (i32, i32) {
    %c0_i32 = arith.constant 0 : i32
    %c0_i32_0 = arith.constant 0 : i32
    return %arg0, %c0_i32 : i32, i32
  }
}

</mosaic_0001>

<llo_original>
// kernel: classifier_forward.1
$region0: #{classifier_forward.1}
  #allocation0 [shape = 'u32[]', space=smem, size = 0x4, offset = 0x4, fixed_abs, tag = 'smem constant byte address 0x4 - core index']
  #allocation1 [shape = 'u32[144,128]{1,0:T(1,128)}', space=vmem, size = 0x12000, scoped, tag = 'internal scratch']
  %s0 = inlined_call_operand.vmem [shape: f32[8,32], index: 0, kind: input, shape index: {}]
  %s1 = inlined_call_operand.vmem [shape: bf16[32,128], index: 1, kind: input, shape index: {}]
  %s2 = inlined_call_operand.vmem [shape: f32[1,128], index: 2, kind: input, shape index: {}]
  %s3 = inlined_call_operand.vmem [shape: bf16[128,128], index: 3, kind: input, shape index: {}]
  %s4 = inlined_call_operand.vmem [shape: f32[1,128], index: 4, kind: input, shape index: {}]
  %s5 = inlined_call_operand.hbm [shape: f32[8,10], index: 5, kind: output, shape index: {}]
  %s6 = sld [smem:[#allocation0]]
  $region30: #{classifier_forward.1} parent=0
    _
  %s8 = ssub.s32 1, %s6
  %s9 = scalar_select 0, %s8, %s6
  $region1: #{classifier_forward.1} parent=0
    #allocation2 [shape = 'u8[8192]{0}', space=vmem, size = 0x2000, scoped, tag = 'output window, operand 0, single buffered']
    #allocation3 [shape = 's32[1]{0}', space=sflag, size = 0x4, scoped, tag = 'scoped memory for classifier_forward.1']
    %10 = vsyncpa [#allocation3], 0
    // Predicated region
    $region2: #{classifier_forward.1} parent=1 // pred_check
      _
    $region3: #{classifier_forward.1} parent=1 // pred_check_branch
      %12 = sbr.rel (0) target = $region5
    $region4: #{classifier_forward.1} parent=1 // pred_region
      _
    $region5: #{classifier_forward.1} parent=1 // pred_fallthru
      _
    // Predicated region
    $region6: #{classifier_forward.1} parent=1 // pred_check
      _
    $region7: #{classifier_forward.1} parent=1 // pred_check_branch
      %14 = sbr.rel (0) target = $region9
    $region8: #{classifier_forward.1} parent=1 // pred_region
      _
    $region9: #{classifier_forward.1} parent=1 // pred_fallthru
      _
    // Predicated region
    $region10: #{classifier_forward.1} parent=1 // pred_check
      _
    $region11: #{classifier_forward.1} parent=1 // pred_check_branch
      %16 = sbr.rel (0) target = $region13
    $region12: #{classifier_forward.1} parent=1 // pred_region
      _
    $region13: #{classifier_forward.1} parent=1 // pred_fallthru
      _
    // Predicated region
    $region14: #{classifier_forward.1} parent=1 // pred_check
      _
    $region15: #{classifier_forward.1} parent=1 // pred_check_branch
      %18 = sbr.rel (0) target = $region17
    $region16: #{classifier_forward.1} parent=1 // pred_region
      _
    $region17: #{classifier_forward.1} parent=1 // pred_fallthru
      _
    // Predicated region
    $region18: #{classifier_forward.1} parent=1 // pred_check
      _
    $region19: #{classifier_forward.1} parent=1 // pred_check_branch
      %20 = sbr.rel (0) target = $region21
    $region20: #{classifier_forward.1} parent=1 // pred_region
      _
    $region21: #{classifier_forward.1} parent=1 // pred_fallthru
      _
    %v22 = vld [vmem:[%s0] sm:$0xff]
    %v23 = vld [vmem:[%s0 + $0x8] sm:$0xff]
    %v24 = vpack.c.bf16 %v23, %v22
    %v25 = vld [vmem:[%s1] sm:$0xf]
    %v26 = vld [vmem:[%s1 + $0x4] sm:$0xf]
    %v27 = vld [vmem:[%s1 + $0x8] sm:$0xf]
    %v28 = vld [vmem:[%s1 + $0xc] sm:$0xf]
    %v29 = vld [vmem:[%s2] sm:$0x1]
    %v31 = vlaneseq
    %v32 = vshrl.u32 %v31, 7
    %v33 = vsub.s32 0, %v32
    %v34 = vrot.slane %v29, %v33
    %v40 = vunpack.c.l.b16 %v25
    %v41 = vunpack.c.l.b16 %v26
    %v42 = vunpack.c.l.b16 %v27
    %v43 = vunpack.c.l.b16 %v28
    %v44 = vpack.c.b16 %v41, %v40
    %v45 = vpack.c.b16 %v43, %v42
    %vm48 = vcmask 261120
    %v50 = vsel %vm48, %v24, 0
    %52 = vmatprep.subr.bf16.mxu0 0
    %53 = vmatpush1.bf16.msra.mxu0 0
    %54 = vmatprep.subr.bf16.mxu0 0
    %55 = vmatpush1.bf16.msra.mxu0 0
    %56 = vmatprep.subr.bf16.mxu0 0
    %57 = vmatpush1.bf16.msra.mxu0 0
    %58 = vmatprep.subr.bf16.mxu0 0
    %59 = vmatpush1.bf16.msra.mxu0 0
    %60 = vmatprep.subr.bf16.mxu0 0
    %61 = vmatpush1.bf16.msra.mxu0 0
    %62 = vmatprep.subr.bf16.mxu0 0
    %63 = vmatpush1.bf16.msra.mxu0 0
    %64 = vmatprep.subr.bf16.mxu0 0
    %65 = vmatpush1.bf16.msra.mxu0 %v45
    %66 = vmatprep.subr.bf16.mxu0 0
    %67 = vmatpush1.bf16.msra.mxu0 %v44
    %68 = vmatprep.subr.bf16.mxu0 0
    %69 = vmatpush2.bf16.msra.mxu0 0
    %70 = vmatprep.subr.bf16.mxu0 0
    %71 = vmatpush2.bf16.msra.mxu0 0
    %72 = vmatprep.subr.bf16.mxu0 0
    %73 = vmatpush2.bf16.msra.mxu0 0
    %74 = vmatprep.subr.bf16.mxu0 0
    %75 = vmatpush2.bf16.msra.mxu0 0
    %76 = vmatprep.subr.bf16.mxu0 0
    %77 = vmatpush2.bf16.msra.mxu0 0
    %78 = vmatprep.subr.bf16.mxu0 0
    %79 = vmatpush2.bf16.msra.mxu0 0
    %80 = vmatprep.subr.bf16.mxu0 0
    %81 = vmatpush2.bf16.msra.mxu0 0
    %82 = vmatprep.subr.bf16.mxu0 0
    %83 = vmatpush2.bf16.msra.mxu0 0
    %84 = vmatprep.mubr.bf16.mxu0 0
    %85 = vmatmul.mubr.bf16.gmra.mxu0 %v50
    %v86 = vpop.f32.mrf.mxu0
    %v87 = vadd.f32 %v34, %v86
    %v88 = vpop.f32.mrf.mxu0
    %v89 = vpop.f32.mrf.mxu0
    %v90 = vadd.f32 %v34, %v89
    %v91 = vpop.f32.mrf.mxu0
    %92 = vdwg.mxu0
    %v93 = vmax.f32 %v87, 0.0
    %v94 = vmax.f32 %v90, 0.0
    %v95 = vpack.c.bf16 %v94, %v93
    %v96 = vld [vmem:[%s3] sm:$0xf]
    %v97 = vld [vmem:[%s3 + $0x4] sm:$0xf]
    %v98 = vld [vmem:[%s3 + $0x8] sm:$0xf]
    %v99 = vld [vmem:[%s3 + $0xc] sm:$0xf]
    %v100 = vld [vmem:[%s3 + $0x10] sm:$0xf]
    %v101 = vld [vmem:[%s3 + $0x14] sm:$0xf]
    %v102 = vld [vmem:[%s3 + $0x18] sm:$0xf]
    %v103 = vld [vmem:[%s3 + $0x1c] sm:$0xf]
    %v104 = vld [vmem:[%s3 + $0x20] sm:$0xf]
    %v105 = vld [vmem:[%s3 + $0x24] sm:$0xf]
    %v106 = vld [vmem:[%s3 + $0x28] sm:$0xf]
    %v107 = vld [vmem:[%s3 + $0x2c] sm:$0xf]
    %v108 = vld [vmem:[%s3 + $0x30] sm:$0xf]
    %v109 = vld [vmem:[%s3 + $0x34] sm:$0xf]
    %v110 = vld [vmem:[%s3 + $0x38] sm:$0xf]
    %v111 = vld [vmem:[%s3 + $0x3c] sm:$0xf]
    %v112 = vld [vmem:[%s4] sm:$0x1]
    %v114 = vlaneseq
    %v115 = vshrl.u32 %v114, 7
    %v116 = vsub.s32 0, %v115
    %v117 = vrot.slane %v112, %v116
    %v135 = vunpack.c.l.b16 %v96
    %v136 = vunpack.c.l.b16 %v97
    %v137 = vunpack.c.l.b16 %v98
    %v138 = vunpack.c.l.b16 %v99
    %v139 = vunpack.c.l.b16 %v100
    %v140 = vunpack.c.l.b16 %v101
    %v141 = vunpack.c.l.b16 %v102
    %v142 = vunpack.c.l.b16 %v103
    %v143 = vunpack.c.l.b16 %v104
    %v144 = vunpack.c.l.b16 %v105
    %v145 = vunpack.c.l.b16 %v106
    %v146 = vunpack.c.l.b16 %v107
    %v147 = vunpack.c.l.b16 %v108
    %v148 = vunpack.c.l.b16 %v109
    %v149 = vunpack.c.l.b16 %v110
    %v150 = vunpack.c.l.b16 %v111
    %v151 = vpack.c.b16 %v136, %v135
    %v152 = vpack.c.b16 %v138, %v137
    %v153 = vpack.c.b16 %v140, %v139
    %v154 = vpack.c.b16 %v142, %v141
    %v155 = vpack.c.b16 %v144, %v143
    %v156 = vpack.c.b16 %v146, %v145
    %v157 = vpack.c.b16 %v148, %v147
    %v158 = vpack.c.b16 %v150, %v149
    %167 = vmatprep.subr.bf16.mxu0 0
    %168 = vmatpush1.bf16.msra.mxu0 %v158
    %169 = vmatprep.subr.bf16.mxu0 0
    %170 = vmatpush1.bf16.msra.mxu0 %v157
    %171 = vmatprep.subr.bf16.mxu0 0
    %172 = vmatpush1.bf16.msra.mxu0 %v156
    %173 = vmatprep.subr.bf16.mxu0 0
    %174 = vmatpush1.bf16.msra.mxu0 %v155
    %175 = vmatprep.subr.bf16.mxu0 0
    %176 = vmatpush1.bf16.msra.mxu0 %v154
    %177 = vmatprep.subr.bf16.mxu0 0
    %178 = vmatpush1.bf16.msra.mxu0 %v153
    %179 = vmatprep.subr.bf16.mxu0 0
    %180 = vmatpush1.bf16.msra.mxu0 %v152
    %181 = vmatprep.subr.bf16.mxu0 0
    %182 = vmatpush1.bf16.msra.mxu0 %v151
    %183 = vmatprep.subr.bf16.mxu0 0
    %184 = vmatpush2.bf16.msra.mxu0 0
    %185 = vmatprep.subr.bf16.mxu0 0
    %186 = vmatpush2.bf16.msra.mxu0 0
    %187 = vmatprep.subr.bf16.mxu0 0
    %188 = vmatpush2.bf16.msra.mxu0 0
    %189 = vmatprep.subr.bf16.mxu0 0
    %190 = vmatpush2.bf16.msra.mxu0 0
    %191 = vmatprep.subr.bf16.mxu0 0
    %192 = vmatpush2.bf16.msra.mxu0 0
    %193 = vmatprep.subr.bf16.mxu0 0
    %194 = vmatpush2.bf16.msra.mxu0 0
    %195 = vmatprep.subr.bf16.mxu0 0
    %196 = vmatpush2.bf16.msra.mxu0 0
    %197 = vmatprep.subr.bf16.mxu0 0
    %198 = vmatpush2.bf16.msra.mxu0 0
    %199 = vmatprep.mubr.bf16.mxu0 0
    %200 = vmatmul.mubr.bf16.gmra.mxu0 %v95
    %v201 = vpop.f32.mrf.mxu0
    %v202 = vadd.f32 %v117, %v201
    %v203 = vpop.f32.mrf.mxu0
    %v204 = vpop.f32.mrf.mxu0
    %v205 = vadd.f32 %v117, %v204
    %v206 = vpop.f32.mrf.mxu0
    %207 = vdwg.mxu0
    %vm208 = vcmask 80896
    %209 = vst.msk [vmem:[#allocation2] sm:$0xff] %vm208, %v202
    %210 = vst.msk [vmem:[#allocation2 + $0x8] sm:$0xff] %vm208, %v205
    // Predicated region
    $region22: #{classifier_forward.1} parent=1 // pred_check
      _
    $region23: #{classifier_forward.1} parent=1 // pred_check_branch
      %212 = sbr.rel (0) target = $region25
    $region24: #{classifier_forward.1} parent=1 // pred_region
      %s214 = ssub.s32 256, 128
      %215 = vsyncadd [#allocation3], %s214
      %s216 = sshll.u32 [#allocation2], 4
      %s217 = int_to_ptr.vmem [resolvable:$true] %s216
      %222 = dma.vmem_to_hbm [thread:$0]  %s217, 128, %s5, [#allocation3], 128, 128, 8
    $region25: #{classifier_forward.1} parent=1 // pred_fallthru
      _
    // Predicated region
    $region26: #{classifier_forward.1} parent=1 // pred_check
      _
    $region27: #{classifier_forward.1} parent=1 // pred_check_branch
      %224 = sbr.rel (0) target = $region29
    $region28: #{classifier_forward.1} parent=1 // pred_region
      %225 = dma.done [#allocation3], 256
    $region29: #{classifier_forward.1} parent=1 // pred_fallthru
      _
    %226 = vsyncpa [#allocation3], 1

</llo_original>
